<compile_context>
chip_gen: v7x
topology: tpu7x:2x2x1
jax: 0.10.0
libtpu: 0.0.40
codegen_flags: <defaults>
</compile_context>

<pallas_src>
import functools

import jax
import jax.numpy as jnp
from jax import lax
from jax.experimental import pallas as pl
from jax.experimental.pallas import tpu as pltpu

MODEL_DIM = 32
NUM_HEADS = 4
FFN_DIM = 64
LN_EPS = 1e-5   # nn.LayerNorm default
MASK_NEG = -1e30


# --------------------------- Pallas kernels ---------------------------------

def _qkv_proj_kernel(x_ref, w_ref, b_ref, qkv_ref):
    # x: (N, D); w: (D, 3D) with the attention scale already folded into the Q
    # columns; b: (1, 3D).  One wide MXU matmul instead of three narrow ones.
    qkv_ref[...] = (jnp.dot(x_ref[...], w_ref[...],
                            preferred_element_type=jnp.float32) + b_ref[...])


def _attention_kernel(q_ref, k_ref, v_ref, mask_ref, attn_ref, ctx_ref, *, num_heads):
    # q/k/v: (M, L, dh) with M = B*H (torch raw-view head split), mask: (B, L, L).
    q = q_ref[...]
    k = k_ref[...]
    v = v_ref[...]
    # Scores (scale already folded into q). Batched over all heads at once.
    s = jnp.einsum('mqd,mkd->mqk', q, k, preferred_element_type=jnp.float32)
    # torch: attn_mask.repeat(num_heads, 1, 1) -> index m maps to mask[m % B];
    # additive large-negative mask replaces masked_fill_(-inf).
    neg = mask_ref[...] * jnp.float32(MASK_NEG)          # (B, L, L)
    s = s + jnp.concatenate([neg] * num_heads, axis=0)    # (M, L, L)
    # softmax over the last dim
    m = jnp.max(s, axis=-1, keepdims=True)
    e = jnp.exp(s - m)
    p = e * pl.reciprocal(jnp.sum(e, axis=-1, keepdims=True), approx=True)
    attn_ref[...] = p
    ctx_ref[...] = jnp.einsum('mqk,mkd->mqd', p, v,
                              preferred_element_type=jnp.float32)


def _layer_norm(y, g, b, eps):
    mu = jnp.mean(y, axis=-1, keepdims=True)
    var = jnp.mean((y - mu) ** 2, axis=-1, keepdims=True)
    return (y - mu) * lax.rsqrt(var + eps) * g + b


def _post_attn_kernel(ctx_ref, res_ref, wo_ref, bo_ref, g1_ref, b1_ref,
                      w1_ref, fb1_ref, w2_ref, fb2_ref, g2_ref, b2_ref,
                      out_ref, *, eps):
    # Fused: final attention projection + residual + LayerNorm1,
    # then PositionalWiseFeedForward (conv1d k=1 == per-row linear) + residual
    # + LayerNorm2.  Dropout p=0 -> identity.
    ctx = ctx_ref[...]
    y = jnp.dot(ctx, wo_ref[...], preferred_element_type=jnp.float32) + bo_ref[...]
    y = res_ref[...] + y
    a = _layer_norm(y, g1_ref[...], b1_ref[...], eps)      # attention output
    h = jnp.dot(a, w1_ref[...], preferred_element_type=jnp.float32) + fb1_ref[...]
    h = jnp.maximum(h, 0.0)
    z = jnp.dot(h, w2_ref[...], preferred_element_type=jnp.float32) + fb2_ref[...]
    out_ref[...] = _layer_norm(a + z, g2_ref[...], b2_ref[...], eps)


# --------------------------- wrapper (glue) ----------------------------------

def encoder_layer_forward(x, attn_mask, p):
    B, L, D = x.shape
    H = NUM_HEADS
    dh = D // H
    N = B * L
    M = B * H
    F = FFN_DIM
    f32 = jnp.float32

    x_flat = x.reshape(N, D)
    vmem = pl.BlockSpec(memory_space=pltpu.MemorySpace.VMEM)

    # torch: scale = (key.size(-1) // num_heads) ** (-0.5)   (integer division!)
    scale = float((dh // H) ** (-0.5))

    # Fused QKV weights; fold the attention scale into the Q columns/bias.
    wqkv = jnp.concatenate([p['wq'].T * scale, p['wk'].T, p['wv'].T], axis=1)   # (D, 3D)
    bqkv = jnp.concatenate([p['bq'] * scale, p['bk'], p['bv']]).reshape(1, 3 * D)

    # ---- fused q/k/v projection (one call, one wide matmul) -----------------
    qkv = pl.pallas_call(
        _qkv_proj_kernel,
        out_shape=jax.ShapeDtypeStruct((N, 3 * D), f32),
        in_specs=[vmem, vmem, vmem],
        out_specs=vmem,
    )(x_flat, wqkv, bqkv)

    # torch: key.view(B*H, -1, dh) on contiguous (B, L, H*dh) == raw reshape
    # (done in the wrapper: it crosses the lane dim, cheap at these sizes).
    q3 = qkv[:, 0 * D:1 * D].reshape(M, L, dh)
    k3 = qkv[:, 1 * D:2 * D].reshape(M, L, dh)
    v3 = qkv[:, 2 * D:3 * D].reshape(M, L, dh)

    # ---- scaled dot-product attention: all heads, single un-gridded call ----
    attn, ctx = pl.pallas_call(
        functools.partial(_attention_kernel, num_heads=H),
        out_shape=(jax.ShapeDtypeStruct((M, L, L), f32),
                   jax.ShapeDtypeStruct((M, L, dh), f32)),
        in_specs=[vmem, vmem, vmem, vmem],
        out_specs=(vmem, vmem),
    )(q3, k3, v3, attn_mask.astype(f32))

    # torch: context.view(B, -1, H*dh) == raw reshape
    ctx_flat = ctx.reshape(N, D)

    # ---- fused: out-proj + residual + LN1 + FFN + residual + LN2 ------------
    out_flat = pl.pallas_call(
        functools.partial(_post_attn_kernel, eps=LN_EPS),
        out_shape=jax.ShapeDtypeStruct((N, D), f32),
        in_specs=[vmem] * 12,
        out_specs=vmem,
    )(ctx_flat, x_flat,
      p['wo'].T, p['bo'].reshape(1, D),
      p['ln1_g'].reshape(1, D), p['ln1_b'].reshape(1, D),
      p['w1'].T, p['fb1'].reshape(1, F),
      p['w2'].T, p['fb2'].reshape(1, D),
      p['ln2_g'].reshape(1, D), p['ln2_b'].reshape(1, D))

    return out_flat.reshape(B, L, D), attn


# --------------------------- reference & params ------------------------------

def _ln_ref(y, g, b):
    mu = jnp.mean(y, axis=-1, keepdims=True)
    var = jnp.mean((y - mu) ** 2, axis=-1, keepdims=True)
    return (y - mu) / jnp.sqrt(var + LN_EPS) * g + b


def ref_encoder_layer(x, attn_mask, p):
    B, L, D = x.shape
    H = NUM_HEADS
    dh = D // H
    q = x @ p['wq'].T + p['bq']
    k = x @ p['wk'].T + p['bk']
    v = x @ p['wv'].T + p['bv']
    q = q.reshape(B * H, L, dh)
    k = k.reshape(B * H, L, dh)
    v = v.reshape(B * H, L, dh)
    mask = jnp.tile(attn_mask, (H, 1, 1))
    scale = (dh // H) ** (-0.5)
    s = jnp.einsum('mqd,mkd->mqk', q, k) * scale
    s = jnp.where(mask, -jnp.inf, s)
    attn = jax.nn.softmax(s, axis=-1)
    ctx = jnp.einsum('mqk,mkd->mqd', attn, v).reshape(B, L, D)
    o = ctx @ p['wo'].T + p['bo']
    y = _ln_ref(x + o, p['ln1_g'], p['ln1_b'])
    h = jnp.maximum(y @ p['w1'].T + p['fb1'], 0.0)
    z = h @ p['w2'].T + p['fb2']
    out = _ln_ref(y + z, p['ln2_g'], p['ln2_b'])
    return out, attn


def init_params(key):
    D, F = MODEL_DIM, FFN_DIM
    ks = jax.random.split(key, 12)

    def w(k, shape, s=0.1):
        return (s * jax.random.normal(k, shape)).astype(jnp.float32)

    return dict(
        wq=w(ks[0], (D, D)), bq=w(ks[1], (D,)),
        wk=w(ks[2], (D, D)), bk=w(ks[3], (D,)),
        wv=w(ks[4], (D, D)), bv=w(ks[5], (D,)),
        wo=w(ks[6], (D, D)), bo=w(ks[7], (D,)),
        # Conv1d(kernel_size=1) weights, squeezed to (out_ch, in_ch)
        w1=w(ks[8], (F, D)), fb1=w(ks[9], (F,)),
        w2=w(ks[10], (D, F)), fb2=w(ks[11], (D,)),
        ln1_g=jnp.ones((D,), jnp.float32), ln1_b=jnp.zeros((D,), jnp.float32),
        ln2_g=jnp.ones((D,), jnp.float32), ln2_b=jnp.zeros((D,), jnp.float32),
    )


if __name__ == "__main__":
    key = jax.random.PRNGKey(0)
    kx, kp = jax.random.split(key)

    B, L, D = 2, 8, MODEL_DIM
    x = jax.random.normal(kx, (B, L, D), dtype=jnp.float32)
    # boolean attention mask [B, L_q, L_k]; mask the last key position
    # (never masks an entire row, so softmax stays finite).
    attn_mask = jnp.zeros((B, L, L), dtype=bool).at[:, :, L - 1].set(True)

    params = init_params(kp)

    out, attn = encoder_layer_forward(x, attn_mask, params)
    jax.block_until_ready((out, attn))

    ref_out, ref_attn = ref_encoder_layer(x, attn_mask, params)
    assert out.shape == (B, L, D) and attn.shape == (B * NUM_HEADS, L, L)
    assert jnp.allclose(out, ref_out, atol=1e-2, rtol=1e-2)
    assert jnp.allclose(attn, ref_attn, atol=1e-2, rtol=1e-2)

    print("KERNEL_OK")
</pallas_src>

<mosaic_0001>
module attributes {stable_mosaic.version = 11 : i64} {
  func.func @_qkv_proj_kernel(%arg0: memref<16x32xf32, #tpu.memory_space<vmem>>, %arg1: memref<32x96xf32, #tpu.memory_space<vmem>>, %arg2: memref<1x96xf32, #tpu.memory_space<vmem>>, %arg3: memref<16x96xf32, #tpu.memory_space<vmem>>) attributes {dimension_semantics = [], scalar_prefetch = 0 : i64, scratch_operands = 0 : i64, tpu.core_type = #tpu.core_type<tc>} {
    %c0 = arith.constant 0 : index
    %c0_0 = arith.constant 0 : index
    %0 = vector.load %arg0[%c0, %c0_0] : memref<16x32xf32, #tpu.memory_space<vmem>>, vector<16x32xf32>
    %c0_1 = arith.constant 0 : index
    %c0_2 = arith.constant 0 : index
    %1 = vector.load %arg1[%c0_1, %c0_2] : memref<32x96xf32, #tpu.memory_space<vmem>>, vector<32x96xf32>
    %cst = arith.constant dense<0.000000e+00> : vector<16x96xf32>
    %2 = tpu.matmul %0, %1, %cst {dimension_numbers = #tpu.dot_dimension_numbers<[1], [0], [0], [1], [0, 0, 1, 1], [], []>} : vector<16x32xf32>, vector<32x96xf32>, vector<16x96xf32> -> vector<16x96xf32>
    %c0_3 = arith.constant 0 : index
    %c0_4 = arith.constant 0 : index
    %3 = vector.load %arg2[%c0_3, %c0_4] : memref<1x96xf32, #tpu.memory_space<vmem>>, vector<1x96xf32>
    %4 = vector.broadcast %3 : vector<1x96xf32> to vector<16x96xf32>
    %5 = arith.addf %2, %4 : vector<16x96xf32>
    %c0_5 = arith.constant 0 : index
    %c0_6 = arith.constant 0 : index
    %6 = vector.load %arg3[%c0_5, %c0_6] : memref<16x96xf32, #tpu.memory_space<vmem>>, vector<16x96xf32>
    tpu.vector_store %arg3[%c0_5, %c0_6], %5 {strides = array<i32>} : memref<16x96xf32, #tpu.memory_space<vmem>>, vector<16x96xf32>,
    return
  }
}

</mosaic_0001>

<llo_original>
// kernel: tpu_custom_call.1
$region0: #{tpu_custom_call.1}
  #allocation0 [shape = 'u32[]', space=smem, size = 0x4, offset = 0x4, fixed_abs, tag = 'smem constant byte address 0x4 - core index']
  #allocation1 [shape = 'u32[144,128]{1,0:T(1,128)}', space=vmem, size = 0x12000, scoped, tag = 'internal scratch']
  %s0 = inlined_call_operand.hbm [shape: f32[16,32], index: 0, kind: input, shape index: {}]
  %s1 = inlined_call_operand.hbm [shape: f32[32,96], index: 1, kind: input, shape index: {}]
  %s2 = inlined_call_operand.vmem [shape: f32[1,96], index: 2, kind: input, shape index: {}]
  %s3 = inlined_call_operand.hbm [shape: f32[16,96], index: 3, kind: output, shape index: {}]
  %s4 = sld [smem:[#allocation0]]
  $region30: #{tpu_custom_call.1} parent=0
    _
  %s6 = ssub.s32 1, %s4
  %s7 = scalar_select 0, %s6, %s4
  $region1: #{tpu_custom_call.1} parent=0
    #allocation2 [shape = 'u8[8192]{0}', space=vmem, size = 0x2000, scoped, tag = 'input window, operand 0, single buffered']
    #allocation3 [shape = 's32[1]{0}', space=sflag, size = 0x4, scoped, tag = 'scoped memory for tpu_custom_call.1']
    #allocation4 [shape = 's32[1]{0}', space=sflag, size = 0x4, scoped, tag = 'scoped memory for tpu_custom_call.1']
    #allocation5 [shape = 'u8[16384]{0}', space=vmem, size = 0x4000, scoped, tag = 'input window, operand 1, single buffered']
    #allocation6 [shape = 's32[1]{0}', space=sflag, size = 0x4, scoped, tag = 'scoped memory for tpu_custom_call.1']
    #allocation7 [shape = 'u8[8192]{0}', space=vmem, size = 0x2000, scoped, tag = 'output window, operand 0, single buffered']
    %8 = vsyncpa [#allocation3], 0
    %9 = vsyncpa [#allocation6], 0
    %10 = vsyncpa [#allocation4], 0
    // Predicated region
    $region2: #{tpu_custom_call.1} parent=1 // pred_check
      _
    $region3: #{tpu_custom_call.1} parent=1 // pred_check_branch
      %12 = sbr.rel (0) target = $region5
    $region4: #{tpu_custom_call.1} parent=1 // pred_region
      %s14 = ssub.s32 256, 256
      %15 = vsyncadd [#allocation3], %s14
      %s16 = sshll.u32 [#allocation2], 4
      %s17 = int_to_ptr.vmem [resolvable:$true] %s16
      %22 = dma.hbm_to_vmem [thread:$0]  %s0, 256, %s17, [#allocation3], 128, 128, 8
    $region5: #{tpu_custom_call.1} parent=1 // pred_fallthru
      _
    // Predicated region
    $region6: #{tpu_custom_call.1} parent=1 // pred_check
      _
    $region7: #{tpu_custom_call.1} parent=1 // pred_check_branch
      %24 = sbr.rel (0) target = $region9
    $region8: #{tpu_custom_call.1} parent=1 // pred_region
      %s26 = ssub.s32 512, 512
      %27 = vsyncadd [#allocation6], %s26
      %s28 = sshll.u32 [#allocation5], 4
      %s29 = int_to_ptr.vmem [resolvable:$true] %s28
      %34 = dma.hbm_to_vmem [thread:$0]  %s1, 512, %s29, [#allocation6], 128, 128, 8
    $region9: #{tpu_custom_call.1} parent=1 // pred_fallthru
      _
    // Predicated region
    $region10: #{tpu_custom_call.1} parent=1 // pred_check
      _
    $region11: #{tpu_custom_call.1} parent=1 // pred_check_branch
      %36 = sbr.rel (0) target = $region13
    $region12: #{tpu_custom_call.1} parent=1 // pred_region
      _
    $region13: #{tpu_custom_call.1} parent=1 // pred_fallthru
      _
    // Predicated region
    $region14: #{tpu_custom_call.1} parent=1 // pred_check
      _
    $region15: #{tpu_custom_call.1} parent=1 // pred_check_branch
      %38 = sbr.rel (0) target = $region17
    $region16: #{tpu_custom_call.1} parent=1 // pred_region
      %39 = dma.done [#allocation3], 256
    $region17: #{tpu_custom_call.1} parent=1 // pred_fallthru
      _
    // Predicated region
    $region18: #{tpu_custom_call.1} parent=1 // pred_check
      _
    $region19: #{tpu_custom_call.1} parent=1 // pred_check_branch
      %41 = sbr.rel (0) target = $region21
    $region20: #{tpu_custom_call.1} parent=1 // pred_region
      %42 = dma.done [#allocation6], 512
    $region21: #{tpu_custom_call.1} parent=1 // pred_fallthru
      _
    %v43 = vld [vmem:[#allocation2] sm:$0xff]
    %v44 = vld [vmem:[#allocation2 + $0x8] sm:$0xff]
    %v45 = vld [vmem:[#allocation5] sm:$0xff]
    %v46 = vld [vmem:[#allocation5 + $0x8] sm:$0xff]
    %v47 = vld [vmem:[#allocation5 + $0x10] sm:$0xff]
    %v48 = vld [vmem:[#allocation5 + $0x18] sm:$0xff]
    %v49 = vld [vmem:[%s2] sm:$0x1]
    %v51 = vlaneseq
    %v52 = vshrl.u32 %v51, 7
    %v53 = vsub.s32 0, %v52
    %v54 = vrot.slane %v49, %v53
    %vm56 = vcmask 261120
    %v58 = vsel %vm56, %v43, 0
    %v61 = vsel %vm56, %v44, 0
    %63 = vmatprep.subr.mxu0 0.0
    %64 = vmatpush1.msra.mxu0 %v45
    %65 = vmatprep.subr.mxu0 0.0
    %66 = vmatpush1.msra.mxu0 %v46
    %67 = vmatprep.subr.mxu0 0.0
    %68 = vmatpush1.msra.mxu0 %v47
    %69 = vmatprep.subr.mxu0 0.0
    %70 = vmatpush1.msra.mxu0 %v48
    %71 = vmatprep.subr.mxu0 0.0
    %72 = vmatpush1.msra.mxu0 0.0
    %73 = vmatprep.subr.mxu0 0.0
    %74 = vmatpush1.msra.mxu0 0.0
    %75 = vmatprep.subr.mxu0 0.0
    %76 = vmatpush1.msra.mxu0 0.0
    %77 = vmatprep.subr.mxu0 0.0
    %78 = vmatpush1.msra.mxu0 0.0
    %79 = vmatprep.subr.mxu0 0.0
    %80 = vmatpush1.msra.mxu0 0.0
    %81 = vmatprep.subr.mxu0 0.0
    %82 = vmatpush1.msra.mxu0 0.0
    %83 = vmatprep.subr.mxu0 0.0
    %84 = vmatpush1.msra.mxu0 0.0
    %85 = vmatprep.subr.mxu0 0.0
    %86 = vmatpush1.msra.mxu0 0.0
    %87 = vmatprep.subr.mxu0 0.0
    %88 = vmatpush1.msra.mxu0 0.0
    %89 = vmatprep.subr.mxu0 0.0
    %90 = vmatpush1.msra.mxu0 0.0
    %91 = vmatprep.subr.mxu0 0.0
    %92 = vmatpush1.msra.mxu0 0.0
    %93 = vmatprep.subr.mxu0 0.0
    %94 = vmatpush1.msra.mxu0 0.0
    %95 = vmatprep.subr.mxu0 0.0
    %96 = vmatpush1.msra.mxu0 0.0
    %97 = vmatprep.subr.mxu0 0.0
    %98 = vmatpush1.msra.mxu0 0.0
    %99 = vmatprep.subr.mxu0 0.0
    %100 = vmatpush1.msra.mxu0 0.0
    %101 = vmatprep.subr.mxu0 0.0
    %102 = vmatpush1.msra.mxu0 0.0
    %103 = vmatprep.subr.mxu0 0.0
    %104 = vmatpush1.msra.mxu0 0.0
    %105 = vmatprep.subr.mxu0 0.0
    %106 = vmatpush1.msra.mxu0 0.0
    %107 = vmatprep.subr.mxu0 0.0
    %108 = vmatpush1.msra.mxu0 0.0
    %109 = vmatprep.subr.mxu0 0.0
    %110 = vmatpush1.msra.mxu0 0.0
    %111 = vmatprep.subr.mxu0 0.0
    %112 = vmatpush1.msra.mxu0 0.0
    %113 = vmatprep.subr.mxu0 0.0
    %114 = vmatpush1.msra.mxu0 0.0
    %115 = vmatprep.subr.mxu0 0.0
    %116 = vmatpush1.msra.mxu0 0.0
    %117 = vmatprep.subr.mxu0 0.0
    %118 = vmatpush1.msra.mxu0 0.0
    %119 = vmatprep.subr.mxu0 0.0
    %120 = vmatpush1.msra.mxu0 0.0
    %121 = vmatprep.subr.mxu0 0.0
    %122 = vmatpush1.msra.mxu0 0.0
    %123 = vmatprep.subr.mxu0 0.0
    %124 = vmatpush1.msra.mxu0 0.0
    %125 = vmatprep.subr.mxu0 0.0
    %126 = vmatpush1.msra.mxu0 0.0
    %127 = vmatprep.mubr.f32.mxu0 0.0
    %128 = vmatmul.mubr.f32.gmra.mrb[0].mxu0 %v58
    %v129 = vpop.f32.mrb[0].mxu0
    %v130 = vadd.f32 %v54, %v129
    %v131 = vpop.f32.mrb[0].mxu0
    %132 = vmatprep.mubr.f32.mxu0 0.0
    %133 = vmatmul.mubr.f32.gmra.mrb[0].mxu0 %v61
    %v134 = vpop.f32.mrb[0].mxu0
    %v135 = vadd.f32 %v54, %v134
    %v136 = vpop.f32.mrb[0].mxu0
    %137 = vdwg.mxu0
    %vm138 = vcmask 785408
    %139 = vst.msk [vmem:[#allocation7] sm:$0xff] %vm138, %v130
    %140 = vst.msk [vmem:[#allocation7 + $0x8] sm:$0xff] %vm138, %v135
    // Predicated region
    $region22: #{tpu_custom_call.1} parent=1 // pred_check
      _
    $region23: #{tpu_custom_call.1} parent=1 // pred_check_branch
      %142 = sbr.rel (0) target = $region25
    $region24: #{tpu_custom_call.1} parent=1 // pred_region
      %s144 = ssub.s32 256, 256
      %145 = vsyncadd [#allocation4], %s144
      %s146 = sshll.u32 [#allocation7], 4
      %s147 = int_to_ptr.vmem [resolvable:$true] %s146
      %152 = dma.vmem_to_hbm [thread:$0]  %s147, 256, %s3, [#allocation4], 128, 128, 8
    $region25: #{tpu_custom_call.1} parent=1 // pred_fallthru
      _
    // Predicated region
    $region26: #{tpu_custom_call.1} parent=1 // pred_check
      _
    $region27: #{tpu_custom_call.1} parent=1 // pred_check_branch
      %154 = sbr.rel (0) target = $region29
    $region28: #{tpu_custom_call.1} parent=1 // pred_region
      %155 = dma.done [#allocation4], 256
    $region29: #{tpu_custom_call.1} parent=1 // pred_fallthru
      _
    %156 = vsyncpa [#allocation3], 1
    %157 = vsyncpa [#allocation6], 1
    %158 = vsyncpa [#allocation4], 1

</llo_original>
